<compile_context>
chip_gen: v7x
topology: tpu7x:2x2x1
jax: 0.10.0
libtpu: 0.0.40
codegen_flags: <defaults>
</compile_context>

<pallas_src>
import jax
import jax.numpy as jnp
from jax.experimental import pallas as pl
from jax.experimental.pallas import tpu as pltpu


def _se_mul_conv1x1_kernel(s_ref, x_ref, w_ref, o_ref, acc_ref):
    # s_ref: (1, tk) f32        x_ref: (HW, tk) f32
    # w_ref: (tk, Cout_blk) bf16   o_ref/acc_ref: (HW, Cout_blk)
    k = pl.program_id(1)

    @pl.when(k == 0)
    def _():
        acc_ref[...] = jnp.zeros_like(acc_ref)

    # SE gate: lane-dense elementwise mul + sigmoid (VPU / EUP).
    gated = (x_ref[...] * jax.nn.sigmoid(s_ref[...])).astype(w_ref.dtype)
    # MXU matmul with f32 accumulation.
    acc_ref[...] += jnp.dot(gated, w_ref[...], preferred_element_type=jnp.float32)

    @pl.when(k == pl.num_programs(1) - 1)
    def _():
        o_ref[...] = acc_ref[...].astype(o_ref.dtype)


def prepare_conv1x1_weight(weight):
    """One-time (param-init) prep: (Cout, Cin, 1, 1) -> (Cin, Cout) bf16.

    Done once outside the hot path; the kernel streams the weight directly.
    """
    Cout, Cin = weight.shape[0], weight.shape[1]
    return weight.reshape(Cout, Cin).T.astype(jnp.bfloat16)


def _num_tensorcores():
    """2 on v7x (2 TC/chip), 1 on v5e/v6e; defaults to 1 if unknown."""
    try:
        kind = jax.devices()[0].device_kind.lower()
    except Exception:
        return 1
    return 2 if "v7" in kind else 1


def _pick_tk(cin, tk):
    """Largest 128-multiple Cin tile <= 768 that divides Cin (pipelines the K DMA)."""
    if tk is not None:
        assert cin % tk == 0, "tk must divide Cin"
        return tk
    for cand in (768, 640, 512, 384, 256, 128):
        if cin % cand == 0:
            return cand
    return cin  # full-extent block (exempt from the (8,128) rule)


def sigmoid_mul_conv1x1(x789, x785, w2d, *, tk=None):
    """x789: (1, Cin, 1, 1), x785: (1, Cin, H, W), w2d: (Cin, Cout) bf16.

    Returns (1, Cout, H, W) f32, matching
    Conv2d(Cin, Cout, 1, bias=False)(sigmoid(x789) * x785)
    (bf16 operand rounding, f32 accumulation).
    """
    N, Cin, H, W = x785.shape
    Cin_w, Cout = w2d.shape
    assert N == 1, "module is defined for batch size 1"
    assert Cin_w == Cin
    HW = H * W

    # Lane-dense 2-D views. The activation transpose is the single accepted
    # wrapper op (an NHWC producer would make it a pure reshape).
    x2d = jnp.transpose(x785.reshape(Cin, HW))   # (HW, Cin)
    s2d = x789.reshape(1, Cin)                   # (1, Cin) lane-dense scale

    tk_ = _pick_tk(Cin, tk)
    n_k = Cin // tk_

    # Cout split is only worth it on 2-TC chips (v7x): share the dominant
    # weight stream across cores; 128-wide blocks keep lane density.
    n_tc = _num_tensorcores()
    if n_tc > 1 and Cout % 128 == 0 and Cout // 128 >= n_tc:
        cout_blk = 128
    else:
        cout_blk = Cout
    n_cout = Cout // cout_blk

    cost = pl.CostEstimate(
        flops=2 * HW * Cin * Cout,
        transcendentals=Cin,
        bytes_accessed=(HW * Cin * 4) + (Cin * 4) + (Cin * Cout * 2) + (HW * Cout * 4),
    )

    out2d = pl.pallas_call(
        _se_mul_conv1x1_kernel,
        out_shape=jax.ShapeDtypeStruct((HW, Cout), jnp.float32),
        grid_spec=pltpu.PrefetchScalarGridSpec(
            num_scalar_prefetch=0,
            grid=(n_cout, n_k),
            in_specs=[
                pl.BlockSpec((1, tk_), lambda j, k: (0, k)),        # SE scale row
                pl.BlockSpec((HW, tk_), lambda j, k: (0, k)),       # activation tile
                pl.BlockSpec((tk_, cout_blk), lambda j, k: (k, j)), # weight tile
            ],
            out_specs=pl.BlockSpec((HW, cout_blk), lambda j, k: (0, j)),
            scratch_shapes=[pltpu.VMEM((HW, cout_blk), jnp.float32)],
        ),
        compiler_params=pltpu.CompilerParams(
            dimension_semantics=("parallel", "arbitrary")),
        cost_estimate=cost,
    )(s2d, x2d, w2d)

    # Back to the module's NCHW output layout (75 KB transpose at the real shape).
    return jnp.transpose(out2d).reshape(N, Cout, H, W)


if __name__ == "__main__":
    # Small shapes consistent with the module (batch 1, SE gate + 1x1 conv).
    # Original: Cin=2304, Cout=384, H=W=7.
    N, Cin, Cout, H, W = 1, 256, 128, 7, 7

    key = jax.random.PRNGKey(0)
    k1, k2, k3 = jax.random.split(key, 3)
    x785 = jax.random.normal(k1, (N, Cin, H, W), dtype=jnp.float32)
    x789 = jax.random.normal(k2, (N, Cin, 1, 1), dtype=jnp.float32)
    # Deterministic conv weight (Kaiming-ish scale), kernel_size=(1,1), no bias.
    weight = jax.random.normal(k3, (Cout, Cin, 1, 1), dtype=jnp.float32) * (
        1.0 / (Cin ** 0.5))

    # Param-init time: reshape/transpose + bf16 cast, done once.
    w2d = prepare_conv1x1_weight(weight)

    # tk=128 -> 2 K-steps at this small size, exercising the accumulator path.
    out = sigmoid_mul_conv1x1(x789, x785, w2d, tk=128)
    jax.block_until_ready(out)
    assert out.shape == (N, Cout, H, W)

    # Reference with the same bf16 operand rounding and f32 accumulation.
    gated = (jax.nn.sigmoid(x789) * x785).astype(jnp.bfloat16).astype(jnp.float32)
    ref = jnp.einsum("oc,nchw->nohw", w2d.astype(jnp.float32).T, gated)
    err = float(jnp.max(jnp.abs(out - ref)))
    assert jnp.allclose(out, ref, atol=2e-2, rtol=2e-2), err
    print("KERNEL_OK")
</pallas_src>

<mosaic_0001>
module attributes {stable_mosaic.version = 11 : i64} {
  func.func @_se_mul_conv1x1_kernel(%arg0: i32, %arg1: i32, %arg2: memref<1x128xf32, #tpu.memory_space<vmem>>, %arg3: memref<49x128xf32, #tpu.memory_space<vmem>>, %arg4: memref<128x128xbf16, #tpu.memory_space<vmem>>, %arg5: memref<49x128xf32, #tpu.memory_space<vmem>>, %arg6: memref<49x128xf32, #tpu.memory_space<vmem>>) attributes {dimension_semantics = [#tpu.dimension_semantics<parallel>, #tpu.dimension_semantics<arbitrary>], iteration_bounds = array<i64: 1, 2>, scalar_prefetch = 0 : i64, scratch_operands = 1 : i64, tpu.core_type = #tpu.core_type<tc>, window_params = [{transform_indices = @transform_0, window_bounds = array<i64: 1, 128>}, {transform_indices = @transform_1, window_bounds = array<i64: 49, 128>}, {transform_indices = @transform_2, window_bounds = array<i64: 128, 128>}, {transform_indices = @transform_3, window_bounds = array<i64: 49, 128>}]} {
    %c0_i32 = arith.constant 0 : i32
    %0 = arith.cmpi eq, %arg1, %c0_i32 : i32
    %1 = arith.extui %0 : i1 to i32
    %c0_i32_0 = arith.constant 0 : i32
    %2 = arith.cmpi ne, %1, %c0_i32_0 : i32
    scf.if %2 {
      %cst_12 = arith.constant 0.000000e+00 : f32
      %21 = vector.broadcast %cst_12 : f32 to vector<49x128xf32>
      %c0_13 = arith.constant 0 : index
      %c0_14 = arith.constant 0 : index
      %22 = vector.load %arg6[%c0_13, %c0_14] : memref<49x128xf32, #tpu.memory_space<vmem>>, vector<49x128xf32>
      tpu.vector_store %arg6[%c0_13, %c0_14], %21 {strides = array<i32>} : memref<49x128xf32, #tpu.memory_space<vmem>>, vector<49x128xf32>,
    } else {
    }
    %c0 = arith.constant 0 : index
    %c0_1 = arith.constant 0 : index
    %3 = vector.load %arg3[%c0, %c0_1] : memref<49x128xf32, #tpu.memory_space<vmem>>, vector<49x128xf32>
    %c0_2 = arith.constant 0 : index
    %c0_3 = arith.constant 0 : index
    %4 = vector.load %arg2[%c0_2, %c0_3] : memref<1x128xf32, #tpu.memory_space<vmem>>, vector<1x128xf32>
    %5 = arith.negf %4 : vector<1x128xf32>
    %6 = math.exp %5 : vector<1x128xf32>
    %cst = arith.constant 1.000000e+00 : f32
    %7 = vector.broadcast %cst : f32 to vector<1x128xf32>
    %8 = arith.addf %7, %6 : vector<1x128xf32>
    %9 = arith.divf %7, %8 : vector<1x128xf32>
    %10 = vector.broadcast %9 : vector<1x128xf32> to vector<49x128xf32>
    %11 = arith.mulf %3, %10 : vector<49x128xf32>
    %12 = arith.truncf %11 : vector<49x128xf32> to vector<49x128xbf16>
    %c0_4 = arith.constant 0 : index
    %c0_5 = arith.constant 0 : index
    %13 = vector.load %arg6[%c0_4, %c0_5] : memref<49x128xf32, #tpu.memory_space<vmem>>, vector<49x128xf32>
    %c0_6 = arith.constant 0 : index
    %c0_7 = arith.constant 0 : index
    %14 = vector.load %arg4[%c0_6, %c0_7] : memref<128x128xbf16, #tpu.memory_space<vmem>>, vector<128x128xbf16>
    %cst_8 = arith.constant dense<0.000000e+00> : vector<49x128xf32>
    %15 = tpu.matmul %12, %14, %cst_8 {dimension_numbers = #tpu.dot_dimension_numbers<[1], [0], [0], [1], [0, 0, 1, 1], [], []>} : vector<49x128xbf16>, vector<128x128xbf16>, vector<49x128xf32> -> vector<49x128xf32>
    %16 = arith.addf %13, %15 : vector<49x128xf32>
    %c0_9 = arith.constant 0 : index
    %c0_10 = arith.constant 0 : index
    %17 = vector.load %arg6[%c0_9, %c0_10] : memref<49x128xf32, #tpu.memory_space<vmem>>, vector<49x128xf32>
    tpu.vector_store %arg6[%c0_9, %c0_10], %16 {strides = array<i32>} : memref<49x128xf32, #tpu.memory_space<vmem>>, vector<49x128xf32>,
    %c1_i32 = arith.constant 1 : i32
    %18 = arith.cmpi eq, %arg1, %c1_i32 : i32
    %19 = arith.extui %18 : i1 to i32
    %c0_i32_11 = arith.constant 0 : i32
    %20 = arith.cmpi ne, %19, %c0_i32_11 : i32
    scf.if %20 {
      %c0_12 = arith.constant 0 : index
      %c0_13 = arith.constant 0 : index
      %21 = vector.load %arg6[%c0_12, %c0_13] : memref<49x128xf32, #tpu.memory_space<vmem>>, vector<49x128xf32>
      %c0_14 = arith.constant 0 : index
      %c0_15 = arith.constant 0 : index
      %22 = vector.load %arg5[%c0_14, %c0_15] : memref<49x128xf32, #tpu.memory_space<vmem>>, vector<49x128xf32>
      tpu.vector_store %arg5[%c0_14, %c0_15], %21 {strides = array<i32>} : memref<49x128xf32, #tpu.memory_space<vmem>>, vector<49x128xf32>,
    } else {
    }
    return
  }
  func.func @transform_0(%arg0: i32, %arg1: i32) -> (i32, i32) {
    %c0_i32 = arith.constant 0 : i32
    %c0_i32_0 = arith.constant 0 : i32
    return %c0_i32, %arg1 : i32, i32
  }
  func.func @transform_1(%arg0: i32, %arg1: i32) -> (i32, i32) {
    %c0_i32 = arith.constant 0 : i32
    %c0_i32_0 = arith.constant 0 : i32
    return %c0_i32, %arg1 : i32, i32
  }
  func.func @transform_2(%arg0: i32, %arg1: i32) -> (i32, i32) {
    %c0_i32 = arith.constant 0 : i32
    return %arg1, %arg0 : i32, i32
  }
  func.func @transform_3(%arg0: i32, %arg1: i32) -> (i32, i32) {
    %c0_i32 = arith.constant 0 : i32
    %c0_i32_0 = arith.constant 0 : i32
    return %c0_i32, %arg0 : i32, i32
  }
}

</mosaic_0001>

<llo_original>
// kernel: tpu_custom_call.1
$region0: #{tpu_custom_call.1}
  #allocation0 [shape = 'u32[]', space=smem, size = 0x4, offset = 0x4, fixed_abs, tag = 'smem constant byte address 0x4 - core index']
  #allocation1 [shape = 'u32[144,128]{1,0:T(1,128)}', space=vmem, size = 0x12000, scoped, tag = 'internal scratch']
  #allocation2 [shape = 'f32[49,128]{1,0:T(8,128)}', space=vmem, size = 0x7000, scoped, tag = 'scratch operand']
  %s0 = inlined_call_operand.hbm [shape: f32[1,256], index: 0, kind: input, shape index: {}]
  %s1 = inlined_call_operand.hbm [shape: f32[49,256], index: 1, kind: input, shape index: {}]
  %s2 = inlined_call_operand.hbm [shape: bf16[256,128], index: 2, kind: input, shape index: {}]
  %s3 = inlined_call_operand.hbm [shape: f32[49,128], index: 3, kind: output, shape index: {}]
  %s4 = sld [smem:[#allocation0]]
  $region65: #{tpu_custom_call.1} parent=0
    _
  %s6 = ssub.s32 1, %s4
  %s7 = scalar_select 0, %s6, %s4
  $region1: #{tpu_custom_call.1} parent=0
    #allocation3 [shape = 'u8[1024]{0}', space=vmem, size = 0x400, scoped, tag = 'input window, operand 0']
    #allocation4 [shape = 's32[2]{0}', space=sflag, size = 0x8, scoped, tag = 'scoped memory for tpu_custom_call.1']
    #allocation5 [shape = 's32[2]{0}', space=sflag, size = 0x8, scoped, tag = 'scoped memory for tpu_custom_call.1']
    #allocation6 [shape = 'u8[57344]{0}', space=vmem, size = 0xe000, scoped, tag = 'input window, operand 1']
    #allocation7 [shape = 's32[2]{0}', space=sflag, size = 0x8, scoped, tag = 'scoped memory for tpu_custom_call.1']
    #allocation8 [shape = 'u8[65536]{0}', space=vmem, size = 0x10000, scoped, tag = 'input window, operand 2']
    #allocation9 [shape = 'u8[28672]{0}', space=vmem, size = 0x7000, scoped, tag = 'output window, operand 0, single buffered']
    %8 = vsyncpa [#allocation4], 0
    %s9 = scalar_lea.sflag [#allocation4], 1
    %10 = vsyncpa %s9, 0
    %11 = vsyncpa [#allocation7], 0
    %s12 = scalar_lea.sflag [#allocation7], 1
    %13 = vsyncpa %s12, 0
    %14 = vsyncpa [#allocation5], 0
    loop: start=0, step=1, limit=4
    $region2: #{tpu_custom_call.1} parent=1 // loop_pre_header
      _
    $region3: #{tpu_custom_call.1} parent=1 // loop_header
      %s16 = sphi 0, %s20
      %p17 = scmp.ge.s32.totalorder %s16, 4
      %s23 = sphi 0, %s35
      %s24 = sphi 0, %s31
      %s25 = sphi 0, %s23
      %s26 = sphi 0, %s24
      %s27 = sphi 0, %s25
      %s28 = sphi 0, %s26
      %s38 = sphi 0, %s40
      %s41 = sphi 0, %s38
      %s42 = sphi 0, %s41
      %s58 = sphi 0, %s42
      %s64 = sphi 0, %s66
      %s67 = sphi 0, %s64
      %s68 = sphi 0, %s67
      %s84 = sphi 0, %s68
      %s92 = sphi 0, %s94
      %s95 = sphi 0, %s92
      %s96 = sphi 0, %s95
      %s112 = sphi 0, %s96
      %s118 = sphi 0, %s120
      %s121 = sphi 0, %s118
      %s122 = sphi 0, %s121
      %s138 = sphi 0, %s122
    $region4: #{tpu_custom_call.1} parent=1 // loop_header_branch
      %19 = sbr.rel (%p17) target = $region8
    $region5: #{tpu_custom_call.1} parent=1 // loop_body
      %s21 = ssub.s32 %s16, 1
      %s22 = ssub.s32 %s16, 2
      %s29 = sadd.s32 1, %s24
      %p30 = scmp.ge.s32.totalorder %s29, 2
      %s31 = scalar_select %p30, 0, %s29
      %s32 = sadd.s32 1, %s23
      %s33 = scalar_select %p30, %s32, %s23
      %p34 = scmp.ge.s32.totalorder %s33, 1
      %s35 = scalar_select %p34, 0, %s33
      %s36 = ssub.s32 %s24, %s31
      %p37 = scmp.eq.s32.totalorder %s36, 0
      %s39 = sadd.s32 %s38, 1
      %s40 = scalar_select %p37, %s38, %s39
      %p43 = pneg %p37
      %p44 = scmp.eq.s32.totalorder %s16, 1
      %p45 = por %p43, %p44
      %p46 = scmp.ne.s32.totalorder %s38, %s41
      %p47 = scmp.eq.s32.totalorder %s16, 0
      %p48 = por %p46, %p47
      %p49 = scmp.ne.s32.totalorder %s38, %s41
      %p50 = scmp.eq.s32.totalorder %s21, 1
      %p51 = por %p49, %p50
      %p52 = scmp.ne.s32.totalorder %s41, %s42
      %p53 = scmp.eq.s32.totalorder %s21, 0
      %p54 = por %p52, %p53
      %p55 = scmp.ne.s32.totalorder %s41, %s42
      %p56 = scmp.eq.s32.totalorder %s22, 1
      %p57 = por %p55, %p56
      %p59 = scmp.ne.s32.totalorder %s42, %s58
      %p60 = scmp.eq.s32.totalorder %s22, 0
      %p61 = por %p59, %p60
      %s62 = ssub.s32 %s24, %s31
      %p63 = scmp.eq.s32.totalorder %s62, 0
      %s65 = sadd.s32 %s64, 1
      %s66 = scalar_select %p63, %s64, %s65
      %p69 = pneg %p63
      %p70 = scmp.eq.s32.totalorder %s16, 1
      %p71 = por %p69, %p70
      %p72 = scmp.ne.s32.totalorder %s64, %s67
      %p73 = scmp.eq.s32.totalorder %s16, 0
      %p74 = por %p72, %p73
      %p75 = scmp.ne.s32.totalorder %s64, %s67
      %p76 = scmp.eq.s32.totalorder %s21, 1
      %p77 = por %p75, %p76
      %p78 = scmp.ne.s32.totalorder %s67, %s68
      %p79 = scmp.eq.s32.totalorder %s21, 0
      %p80 = por %p78, %p79
      %p81 = scmp.ne.s32.totalorder %s67, %s68
      %p82 = scmp.eq.s32.totalorder %s22, 1
      %p83 = por %p81, %p82
      %p85 = scmp.ne.s32.totalorder %s68, %s84
      %p86 = scmp.eq.s32.totalorder %s22, 0
      %p87 = por %p85, %p86
      %s88 = ssub.s32 %s24, %s31
      %s89 = ssub.s32 %s23, %s35
      %s90 = sor.u32 %s88, %s89
      %p91 = scmp.eq.s32.totalorder %s90, 0
      %s93 = sadd.s32 %s92, 1
      %s94 = scalar_select %p91, %s92, %s93
      %p97 = pneg %p91
      %p98 = scmp.eq.s32.totalorder %s16, 1
      %p99 = por %p97, %p98
      %p100 = scmp.ne.s32.totalorder %s92, %s95
      %p101 = scmp.eq.s32.totalorder %s16, 0
      %p102 = por %p100, %p101
      %p103 = scmp.ne.s32.totalorder %s92, %s95
      %p104 = scmp.eq.s32.totalorder %s21, 1
      %p105 = por %p103, %p104
      %p106 = scmp.ne.s32.totalorder %s95, %s96
      %p107 = scmp.eq.s32.totalorder %s21, 0
      %p108 = por %p106, %p107
      %p109 = scmp.ne.s32.totalorder %s95, %s96
      %p110 = scmp.eq.s32.totalorder %s22, 1
      %p111 = por %p109, %p110
      %p113 = scmp.ne.s32.totalorder %s96, %s112
      %p114 = scmp.eq.s32.totalorder %s22, 0
      %p115 = por %p113, %p114
      %s116 = ssub.s32 %s23, %s35
      %p117 = scmp.eq.s32.totalorder %s116, 0
      %s119 = sadd.s32 %s118, 1
      %s120 = scalar_select %p117, %s118, %s119
      %p123 = pneg %p117
      %p124 = scmp.eq.s32.totalorder %s16, 1
      %p125 = por %p123, %p124
      %p126 = scmp.ne.s32.totalorder %s118, %s121
      %p127 = scmp.eq.s32.totalorder %s16, 0
      %p128 = por %p126, %p127
      %p129 = scmp.ne.s32.totalorder %s118, %s121
      %p130 = scmp.eq.s32.totalorder %s21, 1
      %p131 = por %p129, %p130
      %p132 = scmp.ne.s32.totalorder %s121, %s122
      %p133 = scmp.eq.s32.totalorder %s21, 0
      %p134 = por %p132, %p133
      %p135 = scmp.ne.s32.totalorder %s121, %s122
      %p136 = scmp.eq.s32.totalorder %s22, 1
      %p137 = por %p135, %p136
      %p139 = scmp.ne.s32.totalorder %s122, %s138
      %p140 = scmp.eq.s32.totalorder %s22, 0
      %p141 = por %p139, %p140
      %p142 = scmp.le.s32.totalorder 1, %s16
      %p143 = scmp.lt.s32.totalorder %s16, 3
      %p144 = pnand %p142, %p143
      %p145 = pneg %p144
      // Predicated region
      $region9: #{tpu_custom_call.1} parent=5 // pred_check
        _
      $region10: #{tpu_custom_call.1} parent=5 // pred_check_branch
        %147 = sbr.rel (%p144) target = $region12
      $region11: #{tpu_custom_call.1} parent=5 // pred_region
        %s148 = ssub.s32 %s16, 1
      $region12: #{tpu_custom_call.1} parent=5 // pred_fallthru
        _
      %p149 = scmp.lt.s32.totalorder %s16, 2
      // Predicated region
      $region13: #{tpu_custom_call.1} parent=5 // pred_check
        %p150 = pneg %p149
      $region14: #{tpu_custom_call.1} parent=5 // pred_check_branch
        %152 = sbr.rel (%p150) target = $region16
      $region15: #{tpu_custom_call.1} parent=5 // pred_region
        // Predicated region
        $region17: #{tpu_custom_call.1} parent=15 // pred_check
          %p153 = pneg %p48
        $region18: #{tpu_custom_call.1} parent=15 // pred_check_branch
          %155 = sbr.rel (%p153) target = $region20
        $region19: #{tpu_custom_call.1} parent=15 // pred_region
          %s156 = sand.u32 %s38, 1
          %s157 = scalar_lea.sflag [#allocation4], %s156
          %s158 = sand.u32 %s38, 1
          %s159 = scalar_lea.vmem [#allocation3], %s158
          %s161 = ssub.s32 16, 16
          %162 = vsyncadd %s157, %s161
          %s163 = smul.addr %s24, 16
          %s164 = scalar_lea.hbm %s0, %s163
          %s166 = sshll.u32 %s159, 4
          %s167 = int_to_ptr.vmem [resolvable:$true] %s166
          %169 = dma.hbm_to_vmem [thread:$0]  %s164, 16, %s167, %s157
        $region20: #{tpu_custom_call.1} parent=15 // pred_fallthru
          _
        // Predicated region
        $region21: #{tpu_custom_call.1} parent=15 // pred_check
          %p170 = pneg %p74
        $region22: #{tpu_custom_call.1} parent=15 // pred_check_branch
          %172 = sbr.rel (%p170) target = $region24
        $region23: #{tpu_custom_call.1} parent=15 // pred_region
          %s173 = sand.u32 %s16, 1
          %s174 = scalar_lea.sflag [#allocation7], %s173
          %s175 = sand.u32 %s64, 1
          %s176 = smul.addr %s175, 56
          %s177 = scalar_lea.vmem [#allocation6], %s176
          %s179 = ssub.s32 896, 896
          %180 = vsyncadd %s174, %s179
          %s181 = smul.addr %s24, 128
          %s182 = scalar_lea.hbm %s1, %s181
          %s183 = sshll.u32 %s177, 4
          %s184 = int_to_ptr.vmem [resolvable:$true] %s183
          %189 = dma.hbm_to_vmem [thread:$0]  %s182, 896, %s184, %s174, 256, 128, 8
        $region24: #{tpu_custom_call.1} parent=15 // pred_fallthru
          _
        // Predicated region
        $region25: #{tpu_custom_call.1} parent=15 // pred_check
          %p190 = pneg %p102
        $region26: #{tpu_custom_call.1} parent=15 // pred_check_branch
          %192 = sbr.rel (%p190) target = $region28
        $region27: #{tpu_custom_call.1} parent=15 // pred_region
          %s193 = sand.u32 %s16, 1
          %s194 = scalar_lea.sflag [#allocation7], %s193
          %s195 = sand.u32 %s92, 1
          %s196 = smul.addr %s195, 64
          %s197 = scalar_lea.vmem [#allocation8], %s196
          %s198 = smul.u32 16, %s24
          %s200 = ssub.s32 1024, 1024
          %201 = vsyncadd %s194, %s200
          %s202 = sadd.s32 %s23, %s198
          %s203 = smul.addr %s202, 64
          %s204 = scalar_lea.hbm %s2, %s203
          %s205 = sshll.u32 %s197, 4
          %s206 = int_to_ptr.vmem [resolvable:$true] %s205
          %211 = dma.hbm_to_vmem [thread:$0]  %s204, 1024, %s206, %s194, 64, 64, 4
        $region28: #{tpu_custom_call.1} parent=15 // pred_fallthru
          _
      $region16: #{tpu_custom_call.1} parent=5 // pred_fallthru
        _
      %p212 = scmp.le.s32.totalorder 1, %s16
      %p213 = scmp.lt.s32.totalorder %s16, 3
      %p214 = pnand %p212, %p213
      %p215 = pneg %p214
      // Predicated region
      $region29: #{tpu_custom_call.1} parent=5 // pred_check
        _
      $region30: #{tpu_custom_call.1} parent=5 // pred_check_branch
        %217 = sbr.rel (%p214) target = $region32
      $region31: #{tpu_custom_call.1} parent=5 // pred_region
        %s218 = ssub.s32 %s16, 1
        %s219 = sand.u32 %s41, 1
        %s220 = scalar_lea.sflag [#allocation4], %s219
        %s221 = sand.u32 %s41, 1
        %s222 = scalar_lea.vmem [#allocation3], %s221
        // Predicated region
        $region33: #{tpu_custom_call.1} parent=31 // pred_check
          %p223 = pneg %p54
        $region34: #{tpu_custom_call.1} parent=31 // pred_check_branch
          %225 = sbr.rel (%p223) target = $region36
        $region35: #{tpu_custom_call.1} parent=31 // pred_region
          %226 = dma.done %s220, 16
        $region36: #{tpu_custom_call.1} parent=31 // pred_fallthru
          _
        %s227 = sand.u32 %s21, 1
        %s228 = scalar_lea.sflag [#allocation7], %s227
        %s229 = sand.u32 %s67, 1
        %s230 = smul.addr %s229, 56
        %s231 = scalar_lea.vmem [#allocation6], %s230
        // Predicated region
        $region37: #{tpu_custom_call.1} parent=31 // pred_check
          %p232 = pneg %p80
        $region38: #{tpu_custom_call.1} parent=31 // pred_check_branch
          %234 = sbr.rel (%p232) target = $region40
        $region39: #{tpu_custom_call.1} parent=31 // pred_region
          %235 = dma.done %s228, 896
        $region40: #{tpu_custom_call.1} parent=31 // pred_fallthru
          _
        %s236 = sand.u32 %s21, 1
        %s237 = scalar_lea.sflag [#allocation7], %s236
        %s238 = sand.u32 %s95, 1
        %s239 = smul.addr %s238, 64
        %s240 = scalar_lea.vmem [#allocation8], %s239
        // Predicated region
        $region41: #{tpu_custom_call.1} parent=31 // pred_check
          %p241 = pneg %p108
        $region42: #{tpu_custom_call.1} parent=31 // pred_check_branch
          %243 = sbr.rel (%p241) target = $region44
        $region43: #{tpu_custom_call.1} parent=31 // pred_region
          %244 = dma.done %s237, 1024
        $region44: #{tpu_custom_call.1} parent=31 // pred_fallthru
          _
        %s245 = sand.u32 %s41, 1
        %s246 = scalar_lea.sflag [#allocation4], %s245
        %s247 = sand.u32 %s41, 1
        %s248 = scalar_lea.vmem [#allocation3], %s247
        %p249 = pneg %p54
        %p250 = pneg %p51
        %s251 = sand.u32 %s21, 1
        %s252 = scalar_lea.sflag [#allocation7], %s251
        %s253 = sand.u32 %s67, 1
        %s254 = smul.addr %s253, 56
        %s255 = scalar_lea.vmem [#allocation6], %s254
        %p256 = pneg %p80
        %p257 = pneg %p77
        %s258 = sand.u32 %s21, 1
        %s259 = scalar_lea.sflag [#allocation7], %s258
        %s260 = sand.u32 %s95, 1
        %s261 = smul.addr %s260, 64
        %s262 = scalar_lea.vmem [#allocation8], %s261
        %p263 = pneg %p108
        %p264 = pneg %p105
        %p265 = pneg %p134
        %p266 = pneg %p131
        %s267 = smul.u32 16, %s26
        %p269 = scmp.eq.s32.totalorder %s26, 0
        // Predicated region
        $region45: #{tpu_custom_call.1} parent=31 // pred_check
          %p270 = pneg %p269
        $region46: #{tpu_custom_call.1} parent=31 // pred_check_branch
          %272 = sbr.rel (%p270) target = $region48
        $region47: #{tpu_custom_call.1} parent=31 // pred_region
          %273 = vst [vmem:[#allocation2] sm:$0xff] 0.0
          %274 = vst [vmem:[#allocation2 + $0x8] sm:$0xff] 0.0
          %275 = vst [vmem:[#allocation2 + $0x10] sm:$0xff] 0.0
          %276 = vst [vmem:[#allocation2 + $0x18] sm:$0xff] 0.0
          %277 = vst [vmem:[#allocation2 + $0x20] sm:$0xff] 0.0
          %278 = vst [vmem:[#allocation2 + $0x28] sm:$0xff] 0.0
          %279 = vst [vmem:[#allocation2 + $0x30] sm:$0x1] 0.0
        $region48: #{tpu_custom_call.1} parent=31 // pred_fallthru
          _
        %v280 = vld [vmem:[%s231] sm:$0xff]
        %v281 = vld [vmem:[%s231 + $0x8] sm:$0xff]
        %v282 = vld [vmem:[%s231 + $0x10] sm:$0xff]
        %v283 = vld [vmem:[%s231 + $0x18] sm:$0xff]
        %v284 = vld [vmem:[%s231 + $0x20] sm:$0xff]
        %v285 = vld [vmem:[%s231 + $0x28] sm:$0xff]
        %v286 = vld [vmem:[%s231 + $0x30] sm:$0x1]
        %v287 = vld [vmem:[%s222] sm:$0x1]
        %v288 = vxor.u32 %v287, 2147483648
        %v289 = vmul.f32 %v288, 1.442695
        %v290 = vpow.pop %v289
        %v291 = vadd.f32 %v290, 1.0
        %v292 = vrcp.pop %v291
        %v293 = vmul.f32 1.0, %v292
        %v295 = vlaneseq
        %v296 = vshrl.u32 %v295, 7
        %v297 = vsub.s32 0, %v296
        %v298 = vrot.slane %v293, %v297
        %v300 = vmul.f32 %v280, %v298
        %v301 = vmul.f32 %v281, %v298
        %v302 = vmul.f32 %v282, %v298
        %v303 = vmul.f32 %v283, %v298
        %v304 = vmul.f32 %v284, %v298
        %v305 = vmul.f32 %v285, %v298
        %v306 = vmul.f32 %v286, %v298
        %v307 = vpack.c.bf16 %v301, %v300
        %v308 = vpack.c.bf16 %v303, %v302
        %v309 = vpack.c.bf16 %v305, %v304
        %v310 = vpack.c.bf16 %v306, %v306
        %v311 = vld [vmem:[#allocation2] sm:$0xff]
        %v312 = vld [vmem:[#allocation2 + $0x8] sm:$0xff]
        %v313 = vld [vmem:[#allocation2 + $0x10] sm:$0xff]
        %v314 = vld [vmem:[#allocation2 + $0x18] sm:$0xff]
        %v315 = vld [vmem:[#allocation2 + $0x20] sm:$0xff]
        %v316 = vld [vmem:[#allocation2 + $0x28] sm:$0xff]
        %v317 = vld [vmem:[#allocation2 + $0x30] sm:$0x1]
        %v318 = vld [vmem:[%s240] sm:$0xf]
        %v319 = vld [vmem:[%s240 + $0x4] sm:$0xf]
        %v320 = vld [vmem:[%s240 + $0x8] sm:$0xf]
        %v321 = vld [vmem:[%s240 + $0xc] sm:$0xf]
        %v322 = vld [vmem:[%s240 + $0x10] sm:$0xf]
        %v323 = vld [vmem:[%s240 + $0x14] sm:$0xf]
        %v324 = vld [vmem:[%s240 + $0x18] sm:$0xf]
        %v325 = vld [vmem:[%s240 + $0x1c] sm:$0xf]
        %v326 = vld [vmem:[%s240 + $0x20] sm:$0xf]
        %v327 = vld [vmem:[%s240 + $0x24] sm:$0xf]
        %v328 = vld [vmem:[%s240 + $0x28] sm:$0xf]
        %v329 = vld [vmem:[%s240 + $0x2c] sm:$0xf]
        %v330 = vld [vmem:[%s240 + $0x30] sm:$0xf]
        %v331 = vld [vmem:[%s240 + $0x34] sm:$0xf]
        %v332 = vld [vmem:[%s240 + $0x38] sm:$0xf]
        %v333 = vld [vmem:[%s240 + $0x3c] sm:$0xf]
        %v350 = vunpack.c.l.b16 %v318
        %v351 = vunpack.c.l.b16 %v319
        %v352 = vunpack.c.l.b16 %v320
        %v353 = vunpack.c.l.b16 %v321
        %v354 = vunpack.c.l.b16 %v322
        %v355 = vunpack.c.l.b16 %v323
        %v356 = vunpack.c.l.b16 %v324
        %v357 = vunpack.c.l.b16 %v325
        %v358 = vunpack.c.l.b16 %v326
        %v359 = vunpack.c.l.b16 %v327
        %v360 = vunpack.c.l.b16 %v328
        %v361 = vunpack.c.l.b16 %v329
        %v362 = vunpack.c.l.b16 %v330
        %v363 = vunpack.c.l.b16 %v331
        %v364 = vunpack.c.l.b16 %v332
        %v365 = vunpack.c.l.b16 %v333
        %v366 = vpack.c.b16 %v351, %v350
        %v367 = vpack.c.b16 %v353, %v352
        %v368 = vpack.c.b16 %v355, %v354
        %v369 = vpack.c.b16 %v357, %v356
        %v370 = vpack.c.b16 %v359, %v358
        %v371 = vpack.c.b16 %v361, %v360
        %v372 = vpack.c.b16 %v363, %v362
        %v373 = vpack.c.b16 %v365, %v364
        %382 = vmatprep.subr.bf16.mxu0 0
        %383 = vmatpush1.bf16.msra.mxu0 %v366
        %384 = vmatprep.subr.bf16.mxu0 0
        %385 = vmatpush1.bf16.msra.mxu0 %v367
        %386 = vmatprep.subr.bf16.mxu0 0
        %387 = vmatpush1.bf16.msra.mxu0 %v368
        %388 = vmatprep.subr.bf16.mxu0 0
        %389 = vmatpush1.bf16.msra.mxu0 %v369
        %390 = vmatprep.subr.bf16.mxu0 0
        %391 = vmatpush1.bf16.msra.mxu0 %v370
        %392 = vmatprep.subr.bf16.mxu0 0
        %393 = vmatpush1.bf16.msra.mxu0 %v371
        %394 = vmatprep.subr.bf16.mxu0 0
        %395 = vmatpush1.bf16.msra.mxu0 %v372
        %396 = vmatprep.subr.bf16.mxu0 0
        %397 = vmatpush1.bf16.msra.mxu0 %v373
        %398 = vmatprep.subr.bf16.mxu0 0
        %399 = vmatpush1.bf16.msra.mxu0 0
        %400 = vmatprep.subr.bf16.mxu0 0
        %401 = vmatpush1.bf16.msra.mxu0 0
        %402 = vmatprep.subr.bf16.mxu0 0
        %403 = vmatpush1.bf16.msra.mxu0 0
        %404 = vmatprep.subr.bf16.mxu0 0
        %405 = vmatpush1.bf16.msra.mxu0 0
        %406 = vmatprep.subr.bf16.mxu0 0
        %407 = vmatpush1.bf16.msra.mxu0 0
        %408 = vmatprep.subr.bf16.mxu0 0
        %409 = vmatpush1.bf16.msra.mxu0 0
        %410 = vmatprep.subr.bf16.mxu0 0
        %411 = vmatpush1.bf16.msra.mxu0 0
        %412 = vmatprep.subr.bf16.mxu0 0
        %413 = vmatpush1.bf16.msra.mxu0 0
        %414 = vmatprep.mubr.bf16.mxu0 0
        %415 = vmatmul.mubr.bf16.gmra.mrb[0].mxu0 %v307
        %v416 = vpop.f32.mrb[0].mxu0
        %v417 = vadd.f32 0.0, %v416
        %v418 = vpop.f32.mrb[0].mxu0
        %v419 = vpop.f32.mrb[0].mxu0
        %v420 = vadd.f32 0.0, %v419
        %v421 = vpop.f32.mrb[0].mxu0
        %422 = vmatprep.mubr.bf16.mxu0 0
        %423 = vmatmul.mubr.bf16.gmra.mrb[0].mxu0 %v308
        %v424 = vpop.f32.mrb[0].mxu0
        %v425 = vadd.f32 0.0, %v424
        %v426 = vpop.f32.mrb[0].mxu0
        %v427 = vpop.f32.mrb[0].mxu0
        %v428 = vadd.f32 0.0, %v427
        %v429 = vpop.f32.mrb[0].mxu0
        %430 = vmatprep.mubr.bf16.mxu0 0
        %431 = vmatmul.mubr.bf16.gmra.mrb[0].mxu0 %v309
        %v432 = vpop.f32.mrb[0].mxu0
        %v433 = vadd.f32 0.0, %v432
        %v434 = vpop.f32.mrb[0].mxu0
        %v435 = vpop.f32.mrb[0].mxu0
        %v436 = vadd.f32 0.0, %v435
        %v437 = vpop.f32.mrb[0].mxu0
        %438 = vmatprep.mubr.bf16.mxu0 0
        %439 = vmatmul.mubr.bf16.gmra.mrb[0].mxu0 %v310
        %v440 = vpop.f32.mrb[0].mxu0
        %v441 = vadd.f32 0.0, %v440
        %v442 = vpop.f32.mrb[0].mxu0
        %v443 = vpop.f32.mrb[0].mxu0
        %v444 = vpop.f32.mrb[0].mxu0
        %445 = vdwg.mxu0
        %v446 = vadd.f32 %v311, %v417
        %v447 = vadd.f32 %v312, %v420
        %v448 = vadd.f32 %v313, %v425
        %v449 = vadd.f32 %v314, %v428
        %v450 = vadd.f32 %v315, %v433
        %v451 = vadd.f32 %v316, %v436
        %v452 = vadd.f32 %v317, %v441
        %453 = vst [vmem:[#allocation2] sm:$0xff] %v446
        %454 = vst [vmem:[#allocation2 + $0x8] sm:$0xff] %v447
        %455 = vst [vmem:[#allocation2 + $0x10] sm:$0xff] %v448
        %456 = vst [vmem:[#allocation2 + $0x18] sm:$0xff] %v449
        %457 = vst [vmem:[#allocation2 + $0x20] sm:$0xff] %v450
        %458 = vst [vmem:[#allocation2 + $0x28] sm:$0xff] %v451
        %459 = vst [vmem:[#allocation2 + $0x30] sm:$0x1] %v452
        %p460 = scmp.eq.s32.totalorder %s26, 1
        // Predicated region
        $region49: #{tpu_custom_call.1} parent=31 // pred_check
          %p461 = pneg %p460
        $region50: #{tpu_custom_call.1} parent=31 // pred_check_branch
          %463 = sbr.rel (%p461) target = $region52
        $region51: #{tpu_custom_call.1} parent=31 // pred_region
          %v464 = vld [vmem:[#allocation2] sm:$0xff]
          %v465 = vld [vmem:[#allocation2 + $0x8] sm:$0xff]
          %v466 = vld [vmem:[#allocation2 + $0x10] sm:$0xff]
          %v467 = vld [vmem:[#allocation2 + $0x18] sm:$0xff]
          %v468 = vld [vmem:[#allocation2 + $0x20] sm:$0xff]
          %v469 = vld [vmem:[#allocation2 + $0x28] sm:$0xff]
          %v470 = vld [vmem:[#allocation2 + $0x30] sm:$0x1]
          %471 = vst [vmem:[#allocation9] sm:$0xff] %v464
          %472 = vst [vmem:[#allocation9 + $0x8] sm:$0xff] %v465
          %473 = vst [vmem:[#allocation9 + $0x10] sm:$0xff] %v466
          %474 = vst [vmem:[#allocation9 + $0x18] sm:$0xff] %v467
          %475 = vst [vmem:[#allocation9 + $0x20] sm:$0xff] %v468
          %476 = vst [vmem:[#allocation9 + $0x28] sm:$0xff] %v469
          %477 = vst [vmem:[#allocation9 + $0x30] sm:$0x1] %v470
        $region52: #{tpu_custom_call.1} parent=31 // pred_fallthru
          _
        // Predicated region
        $region53: #{tpu_custom_call.1} parent=31 // pred_check
          %p478 = pneg %p131
        $region54: #{tpu_custom_call.1} parent=31 // pred_check_branch
          %480 = sbr.rel (%p478) target = $region56
        $region55: #{tpu_custom_call.1} parent=31 // pred_region
          %s482 = ssub.s32 896, 896
          %483 = vsyncadd [#allocation5], %s482
          %s484 = smul.addr %s25, 128
          %s485 = scalar_lea.hbm %s3, %s484
          %s486 = sshll.u32 [#allocation9], 4
          %s487 = int_to_ptr.vmem [resolvable:$true] %s486
          %492 = dma.vmem_to_hbm [thread:$0]  %s487, 896, %s485, [#allocation5], 128, 128, 8
        $region56: #{tpu_custom_call.1} parent=31 // pred_fallthru
          _
        // Predicated region
        $region57: #{tpu_custom_call.1} parent=31 // pred_check
          %p493 = pneg %p131
        $region58: #{tpu_custom_call.1} parent=31 // pred_check_branch
          %495 = sbr.rel (%p493) target = $region60
        $region59: #{tpu_custom_call.1} parent=31 // pred_region
          %496 = dma.done [#allocation5], 896
        $region60: #{tpu_custom_call.1} parent=31 // pred_fallthru
          _
      $region32: #{tpu_custom_call.1} parent=5 // pred_fallthru
        _
      %p497 = scmp.le.s32.totalorder 2, %s16
      // Predicated region
      $region61: #{tpu_custom_call.1} parent=5 // pred_check
        %p498 = pneg %p497
      $region62: #{tpu_custom_call.1} parent=5 // pred_check_branch
        %500 = sbr.rel (%p498) target = $region64
      $region63: #{tpu_custom_call.1} parent=5 // pred_region
        %s501 = ssub.s32 %s16, 2
      $region64: #{tpu_custom_call.1} parent=5 // pred_fallthru
        _
    $region6: #{tpu_custom_call.1} parent=1 // loop_footer
      %s20 = sadd.s32 1, %s16
    $region7: #{tpu_custom_call.1} parent=1 // loop_footer_branch
      %15 = sbr.rel target = $region3
    $region8: #{tpu_custom_call.1} parent=1 // loop_exit
      _
    %502 = vsyncpa [#allocation4], 1
    %s503 = scalar_lea.sflag [#allocation4], 1
    %504 = vsyncpa %s503, 1
    %505 = vsyncpa [#allocation7], 1
    %s506 = scalar_lea.sflag [#allocation7], 1
    %507 = vsyncpa %s506, 1
    %508 = vsyncpa [#allocation5], 1
    %s509 = scalar_lea.sflag [#allocation5], 1
    %510 = vsyncpa %s509, 1

</llo_original>
